<compile_context>
chip_gen: v7x
topology: tpu7x:2x2x1
jax: 0.10.0
libtpu: 0.0.40
codegen_flags: <defaults>
</compile_context>

<pallas_src>
import functools

import jax
import jax.numpy as jnp
from jax.experimental import pallas as pl
from jax.experimental.pallas import tpu as pltpu


def _round_up(n, m):
    return ((n + m - 1) // m) * m


def _event_model_kernel(x_ref, w_fc_ref, b_fc_ref, w_cls_ref, b_cls_ref, o_ref,
                        *, L, H):
    # x_ref: (TB, L*H) lane-dense slab in its native dtype (f32 or bf16).
    # event_embedding.sum(1): L static, lane-aligned (H = 6*128) slices,
    # accumulated in f32 — the only live temp is one (TB, H) f32 tile.
    s = x_ref[:, 0:H].astype(jnp.float32)
    for l in range(1, L):
        s = s + x_ref[:, l * H:(l + 1) * H].astype(jnp.float32)
    # fc: Linear(768, fusion_dim); bias added post-MXU. Compute has huge slack
    # (HBM-bound kernel), so f32 matmuls keep full accuracy for free.
    h = jnp.dot(s, w_fc_ref[...], preferred_element_type=jnp.float32) + b_fc_ref[...]
    # dropout (eval) == identity
    # clss: Linear(fusion_dim, output_dim)
    logits = (jnp.dot(h, w_cls_ref[...], preferred_element_type=jnp.float32)
              + b_cls_ref[...])
    # dropout (eval) == identity, then sigmoid in f32 (v5e-safe: no bf16 EUP).
    o_ref[...] = jax.nn.sigmoid(logits)


def prepare_event_model_params(w_fc, b_fc, w_cls, b_cls):
    """One-time weight prep (hoisted out of the per-call forward).

    Pads fusion dim 300->384 and output dim 25->128 so intermediate / output
    tiles are lane-dense (clean MXU tiles, unmasked vst). Weights stay f32:
    they are tiny and resident, so there is no bandwidth reason to round them.
    Returns (w_fc_p, b_fc_p, w_cls_p, b_cls_p, output_dim).
    """
    H, F = w_fc.shape
    O = w_cls.shape[1]
    F_pad = _round_up(F, 128)
    O_pad = _round_up(O, 128)
    w_fc_p = jnp.zeros((H, F_pad), jnp.float32).at[:, :F].set(w_fc.astype(jnp.float32))
    b_fc_p = jnp.zeros((1, F_pad), jnp.float32).at[0, :F].set(b_fc.astype(jnp.float32))
    w_cls_p = jnp.zeros((F_pad, O_pad), jnp.float32).at[:F, :O].set(
        w_cls.astype(jnp.float32))
    b_cls_p = jnp.zeros((1, O_pad), jnp.float32).at[0, :O].set(
        b_cls.astype(jnp.float32))
    return w_fc_p, b_fc_p, w_cls_p, b_cls_p, int(O)


def _default_tb(b_pad, align):
    # v7x: 64 MiB VMEM / 2 TensorCores -> smaller tiles so the batch grid has
    # >= 2 steps for megacore sharding and double-buffer overlap.
    # v5e / v6e: 128 MiB VMEM -> bigger tiles to amortize the ~0.35 us
    # per-grid-step overhead on this HBM-bandwidth-bound kernel.
    try:
        vmem = getattr(pltpu.get_tpu_info(), "vmem_capacity_bytes",
                       128 * 1024 * 1024)
    except Exception:  # e.g. interpret mode / no TPU info available
        vmem = 128 * 1024 * 1024
    cap = 256 if vmem <= 64 * 1024 * 1024 else 512
    cap = _round_up(cap, align)
    return min(b_pad, cap)


@functools.partial(jax.jit, static_argnames=("out_dim", "tb"))
def _event_model_forward_impl(x, w_fc_p, b_fc_p, w_cls_p, b_cls_p, *, out_dim, tb):
    B, L, H = x.shape
    F_pad = w_fc_p.shape[1]
    O_pad = w_cls_p.shape[1]

    # Lane-dense 2D view of x (free, contiguous row-major reshape).
    x2d = x.reshape(B, L * H)

    # Sublane-align the batch dim (8 rows f32 / 16 rows bf16). A trailing
    # partial grid block (B_pad % tb != 0) is fine: rows are independent, and
    # out-of-range rows are masked on writeback.
    align = 16 if x2d.dtype == jnp.bfloat16 else 8
    B_pad = _round_up(B, align)
    if B_pad != B:
        x2d = jnp.pad(x2d, ((0, B_pad - B), (0, 0)))

    grid = (pl.cdiv(B_pad, tb),)

    # Real VMEM need: double-buffered x tiles + resident weights + out tiles,
    # plus headroom for compiler scratch. Never the full physical VMEM (v7x).
    x_tile_bytes = tb * L * H * x2d.dtype.itemsize
    w_bytes = 4 * (H * F_pad + F_pad + F_pad * O_pad + O_pad)
    o_tile_bytes = tb * O_pad * 4
    vmem_need = 2 * x_tile_bytes + 2 * w_bytes + 2 * o_tile_bytes
    vmem_limit = int(min(vmem_need + (16 << 20), 48 << 20))

    kernel = functools.partial(_event_model_kernel, L=L, H=H)
    out_padded = pl.pallas_call(
        kernel,
        out_shape=jax.ShapeDtypeStruct((B_pad, O_pad), jnp.float32),
        grid=grid,
        in_specs=[
            # x: streamed per grid step (double-buffered pipeline over batch).
            pl.BlockSpec((tb, L * H), lambda i: (i, 0)),
            # Weights / biases: constant index_map -> resident, DMA'd once.
            pl.BlockSpec((H, F_pad), lambda i: (0, 0)),
            pl.BlockSpec((1, F_pad), lambda i: (0, 0)),
            pl.BlockSpec((F_pad, O_pad), lambda i: (0, 0)),
            pl.BlockSpec((1, O_pad), lambda i: (0, 0)),
        ],
        out_specs=pl.BlockSpec((tb, O_pad), lambda i: (i, 0)),
        compiler_params=pltpu.CompilerParams(
            dimension_semantics=("parallel",),   # megacore sharding on v7x
            vmem_limit_bytes=vmem_limit,
        ),
    )(x2d, w_fc_p, b_fc_p, w_cls_p, b_cls_p)

    # Strip batch- and lane-padding back to the real output shape.
    return out_padded[:B, :out_dim]


def event_model_forward(x, params, *, tb=None):
    """x: [B, L, 768] f32/bf16 pooled embeddings; params from prepare_*()."""
    w_fc_p, b_fc_p, w_cls_p, b_cls_p, out_dim = params
    B = x.shape[0]
    align = 16 if x.dtype == jnp.bfloat16 else 8
    B_pad = _round_up(B, align)
    if tb is None:
        tb = _default_tb(B_pad, align)
    tb = int(min(_round_up(int(tb), align), B_pad))
    return _event_model_forward_impl(x, w_fc_p, b_fc_p, w_cls_p, b_cls_p,
                                     out_dim=int(out_dim), tb=tb)


def init_params(key, hidden=768, fusion_dim=300, output_dim=25):
    """Deterministic PyTorch-style (uniform +/- 1/sqrt(fan_in)) init."""
    k1, k2, k3, k4 = jax.random.split(key, 4)
    bound_fc = 1.0 / jnp.sqrt(hidden)
    bound_cls = 1.0 / jnp.sqrt(fusion_dim)
    w_fc = jax.random.uniform(k1, (hidden, fusion_dim), jnp.float32,
                              minval=-bound_fc, maxval=bound_fc)
    b_fc = jax.random.uniform(k2, (fusion_dim,), jnp.float32,
                              minval=-bound_fc, maxval=bound_fc)
    w_cls = jax.random.uniform(k3, (fusion_dim, output_dim), jnp.float32,
                               minval=-bound_cls, maxval=bound_cls)
    b_cls = jax.random.uniform(k4, (output_dim,), jnp.float32,
                               minval=-bound_cls, maxval=bound_cls)
    return w_fc, b_fc, w_cls, b_cls


if __name__ == "__main__":
    key = jax.random.PRNGKey(0)
    k_x1, k_x2, k_p = jax.random.split(key, 3)

    L, H = 8, 768                # up to 8 events per patient, BERT hidden 768
    FUSION, OUT = 300, 25

    w_fc, b_fc, w_cls, b_cls = init_params(k_p, H, FUSION, OUT)
    # One-time weight prep (padding / f32 layout), outside the hot path.
    params = prepare_event_model_params(w_fc, b_fc, w_cls, b_cls)

    def ref_fn(xv):
        return jax.nn.sigmoid((jnp.sum(xv, axis=1) @ w_fc + b_fc) @ w_cls + b_cls)

    # Test 1: tiny batch (B=2) — exercises batch padding 2 -> 8.
    x1 = jax.random.normal(k_x1, (2, L, H), dtype=jnp.float32)
    out1 = jax.block_until_ready(event_model_forward(x1, params))
    assert out1.shape == (2, OUT), out1.shape
    assert jnp.allclose(out1, ref_fn(x1), atol=1e-3, rtol=1e-3), (
        float(jnp.max(jnp.abs(out1 - ref_fn(x1)))))

    # Test 2: odd batch (B=10) — exercises padding + slice-back on another tile.
    x2 = jax.random.normal(k_x2, (10, L, H), dtype=jnp.float32)
    out2 = jax.block_until_ready(event_model_forward(x2, params))
    assert out2.shape == (10, OUT), out2.shape
    assert jnp.allclose(out2, ref_fn(x2), atol=1e-3, rtol=1e-3), (
        float(jnp.max(jnp.abs(out2 - ref_fn(x2)))))

    print("KERNEL_OK")
</pallas_src>

<mosaic_0001>
module attributes {stable_mosaic.version = 11 : i64} {
  func.func @_event_model_kernel(%arg0: i32, %arg1: memref<8x6144xf32, #tpu.memory_space<vmem>>, %arg2: memref<768x384xf32, #tpu.memory_space<vmem>>, %arg3: memref<1x384xf32, #tpu.memory_space<vmem>>, %arg4: memref<384x128xf32, #tpu.memory_space<vmem>>, %arg5: memref<1x128xf32, #tpu.memory_space<vmem>>, %arg6: memref<8x128xf32, #tpu.memory_space<vmem>>) attributes {dimension_semantics = [#tpu.dimension_semantics<parallel>], iteration_bounds = array<i64: 1>, scalar_prefetch = 0 : i64, scratch_operands = 0 : i64, tpu.core_type = #tpu.core_type<tc>, window_params = [{transform_indices = @transform_0, window_bounds = array<i64: 8, 6144>}, {pipeline_mode = #tpu.pipeline_mode<synchronous>, transform_indices = @transform_1, window_bounds = array<i64: 768, 384>}, {pipeline_mode = #tpu.pipeline_mode<synchronous>, transform_indices = @transform_2, window_bounds = array<i64: 1, 384>}, {pipeline_mode = #tpu.pipeline_mode<synchronous>, transform_indices = @transform_3, window_bounds = array<i64: 384, 128>}, {pipeline_mode = #tpu.pipeline_mode<synchronous>, transform_indices = @transform_4, window_bounds = array<i64: 1, 128>}, {transform_indices = @transform_5, window_bounds = array<i64: 8, 128>}]} {
    %c0 = arith.constant 0 : index
    %c0_0 = arith.constant 0 : index
    %0 = vector.load %arg1[%c0, %c0_0] : memref<8x6144xf32, #tpu.memory_space<vmem>>, vector<8x768xf32>
    %c0_1 = arith.constant 0 : index
    %c768 = arith.constant 768 : index
    %1 = vector.load %arg1[%c0_1, %c768] : memref<8x6144xf32, #tpu.memory_space<vmem>>, vector<8x768xf32>
    %2 = arith.addf %0, %1 : vector<8x768xf32>
    %c0_2 = arith.constant 0 : index
    %c1536 = arith.constant 1536 : index
    %3 = vector.load %arg1[%c0_2, %c1536] : memref<8x6144xf32, #tpu.memory_space<vmem>>, vector<8x768xf32>
    %4 = arith.addf %2, %3 : vector<8x768xf32>
    %c0_3 = arith.constant 0 : index
    %c2304 = arith.constant 2304 : index
    %5 = vector.load %arg1[%c0_3, %c2304] : memref<8x6144xf32, #tpu.memory_space<vmem>>, vector<8x768xf32>
    %6 = arith.addf %4, %5 : vector<8x768xf32>
    %c0_4 = arith.constant 0 : index
    %c3072 = arith.constant 3072 : index
    %7 = vector.load %arg1[%c0_4, %c3072] : memref<8x6144xf32, #tpu.memory_space<vmem>>, vector<8x768xf32>
    %8 = arith.addf %6, %7 : vector<8x768xf32>
    %c0_5 = arith.constant 0 : index
    %c3840 = arith.constant 3840 : index
    %9 = vector.load %arg1[%c0_5, %c3840] : memref<8x6144xf32, #tpu.memory_space<vmem>>, vector<8x768xf32>
    %10 = arith.addf %8, %9 : vector<8x768xf32>
    %c0_6 = arith.constant 0 : index
    %c4608 = arith.constant 4608 : index
    %11 = vector.load %arg1[%c0_6, %c4608] : memref<8x6144xf32, #tpu.memory_space<vmem>>, vector<8x768xf32>
    %12 = arith.addf %10, %11 : vector<8x768xf32>
    %c0_7 = arith.constant 0 : index
    %c5376 = arith.constant 5376 : index
    %13 = vector.load %arg1[%c0_7, %c5376] : memref<8x6144xf32, #tpu.memory_space<vmem>>, vector<8x768xf32>
    %14 = arith.addf %12, %13 : vector<8x768xf32>
    %c0_8 = arith.constant 0 : index
    %c0_9 = arith.constant 0 : index
    %15 = vector.load %arg2[%c0_8, %c0_9] : memref<768x384xf32, #tpu.memory_space<vmem>>, vector<768x384xf32>
    %cst = arith.constant dense<0.000000e+00> : vector<8x384xf32>
    %16 = tpu.matmul %14, %15, %cst {dimension_numbers = #tpu.dot_dimension_numbers<[1], [0], [0], [1], [0, 0, 1, 1], [], []>} : vector<8x768xf32>, vector<768x384xf32>, vector<8x384xf32> -> vector<8x384xf32>
    %c0_10 = arith.constant 0 : index
    %c0_11 = arith.constant 0 : index
    %17 = vector.load %arg3[%c0_10, %c0_11] : memref<1x384xf32, #tpu.memory_space<vmem>>, vector<1x384xf32>
    %18 = vector.broadcast %17 : vector<1x384xf32> to vector<8x384xf32>
    %19 = arith.addf %16, %18 : vector<8x384xf32>
    %c0_12 = arith.constant 0 : index
    %c0_13 = arith.constant 0 : index
    %20 = vector.load %arg4[%c0_12, %c0_13] : memref<384x128xf32, #tpu.memory_space<vmem>>, vector<384x128xf32>
    %cst_14 = arith.constant dense<0.000000e+00> : vector<8x128xf32>
    %21 = tpu.matmul %19, %20, %cst_14 {dimension_numbers = #tpu.dot_dimension_numbers<[1], [0], [0], [1], [0, 0, 1, 1], [], []>} : vector<8x384xf32>, vector<384x128xf32>, vector<8x128xf32> -> vector<8x128xf32>
    %c0_15 = arith.constant 0 : index
    %c0_16 = arith.constant 0 : index
    %22 = vector.load %arg5[%c0_15, %c0_16] : memref<1x128xf32, #tpu.memory_space<vmem>>, vector<1x128xf32>
    %23 = vector.broadcast %22 : vector<1x128xf32> to vector<8x128xf32>
    %24 = arith.addf %21, %23 : vector<8x128xf32>
    %25 = arith.negf %24 : vector<8x128xf32>
    %26 = math.exp %25 : vector<8x128xf32>
    %cst_17 = arith.constant 1.000000e+00 : f32
    %27 = vector.broadcast %cst_17 : f32 to vector<8x128xf32>
    %28 = arith.addf %27, %26 : vector<8x128xf32>
    %29 = arith.divf %27, %28 : vector<8x128xf32>
    %c0_18 = arith.constant 0 : index
    %c0_19 = arith.constant 0 : index
    %30 = vector.load %arg6[%c0_18, %c0_19] : memref<8x128xf32, #tpu.memory_space<vmem>>, vector<8x128xf32>
    tpu.vector_store %arg6[%c0_18, %c0_19], %29 {strides = array<i32>} : memref<8x128xf32, #tpu.memory_space<vmem>>, vector<8x128xf32>,
    return
  }
  func.func @transform_0(%arg0: i32) -> (i32, i32) {
    %c0_i32 = arith.constant 0 : i32
    %c0_i32_0 = arith.constant 0 : i32
    return %arg0, %c0_i32 : i32, i32
  }
  func.func @transform_1(%arg0: i32) -> (i32, i32) {
    %c0_i32 = arith.constant 0 : i32
    %c0_i32_0 = arith.constant 0 : i32
    %c0_i32_1 = arith.constant 0 : i32
    return %c0_i32, %c0_i32_0 : i32, i32
  }
  func.func @transform_2(%arg0: i32) -> (i32, i32) {
    %c0_i32 = arith.constant 0 : i32
    %c0_i32_0 = arith.constant 0 : i32
    %c0_i32_1 = arith.constant 0 : i32
    return %c0_i32, %c0_i32_0 : i32, i32
  }
  func.func @transform_3(%arg0: i32) -> (i32, i32) {
    %c0_i32 = arith.constant 0 : i32
    %c0_i32_0 = arith.constant 0 : i32
    %c0_i32_1 = arith.constant 0 : i32
    return %c0_i32, %c0_i32_0 : i32, i32
  }
  func.func @transform_4(%arg0: i32) -> (i32, i32) {
    %c0_i32 = arith.constant 0 : i32
    %c0_i32_0 = arith.constant 0 : i32
    %c0_i32_1 = arith.constant 0 : i32
    return %c0_i32, %c0_i32_0 : i32, i32
  }
  func.func @transform_5(%arg0: i32) -> (i32, i32) {
    %c0_i32 = arith.constant 0 : i32
    %c0_i32_0 = arith.constant 0 : i32
    return %arg0, %c0_i32 : i32, i32
  }
}

</mosaic_0001>

<llo_original>
// kernel: _event_model_forward_impl.1
$region0: #{_event_model_forward_impl.1}
  #allocation0 [shape = 'u32[]', space=smem, size = 0x4, offset = 0x4, fixed_abs, tag = 'smem constant byte address 0x4 - core index']
  #allocation1 [shape = 'u32[144,128]{1,0:T(1,128)}', space=vmem, size = 0x12000, scoped, tag = 'internal scratch']
  %s0 = inlined_call_operand.vmem [shape: f32[8,6144], index: 0, kind: input, shape index: {}]
  %s1 = inlined_call_operand.hbm [shape: f32[768,384], index: 1, kind: input, shape index: {}]
  %s2 = inlined_call_operand.hbm [shape: f32[1,384], index: 2, kind: input, shape index: {}]
  %s3 = inlined_call_operand.hbm [shape: f32[384,128], index: 3, kind: input, shape index: {}]
  %s4 = inlined_call_operand.hbm [shape: f32[1,128], index: 4, kind: input, shape index: {}]
  %s5 = inlined_call_operand.vmem [shape: f32[8,128], index: 5, kind: output, shape index: {}]
  %s6 = sld [smem:[#allocation0]]
  $region46: #{_event_model_forward_impl.1} parent=0
    _
  %s8 = ssub.s32 1, %s6
  %s9 = scalar_select 0, %s8, %s6
  $region1: #{_event_model_forward_impl.1} parent=0
    #allocation2 [shape = 'u8[1179648]{0}', space=vmem, size = 0x120000, scoped, tag = 'input window, operand 1, single buffered']
    #allocation3 [shape = 's32[1]{0}', space=sflag, size = 0x4, scoped, tag = 'scoped memory for _event_model_forward_impl.1']
    #allocation4 [shape = 'u8[1536]{0}', space=vmem, size = 0x800, scoped, tag = 'input window, operand 2, single buffered']
    #allocation5 [shape = 's32[1]{0}', space=sflag, size = 0x4, scoped, tag = 'scoped memory for _event_model_forward_impl.1']
    #allocation6 [shape = 'u8[196608]{0}', space=vmem, size = 0x30000, scoped, tag = 'input window, operand 3, single buffered']
    #allocation7 [shape = 'u8[512]{0}', space=vmem, size = 0x400, scoped, tag = 'input window, operand 4, single buffered']
    #allocation8 [shape = 's32[1]{0}', space=sflag, size = 0x4, scoped, tag = 'scoped memory for _event_model_forward_impl.1']
    %10 = vsyncpa [#allocation3], 0
    %11 = vsyncpa [#allocation5], 0
    %12 = vsyncpa [#allocation8], 0
    // Predicated region
    $region2: #{_event_model_forward_impl.1} parent=1 // pred_check
      _
    $region3: #{_event_model_forward_impl.1} parent=1 // pred_check_branch
      %14 = sbr.rel (0) target = $region5
    $region4: #{_event_model_forward_impl.1} parent=1 // pred_region
      _
    $region5: #{_event_model_forward_impl.1} parent=1 // pred_fallthru
      _
    // Predicated region
    $region6: #{_event_model_forward_impl.1} parent=1 // pred_check
      _
    $region7: #{_event_model_forward_impl.1} parent=1 // pred_check_branch
      %16 = sbr.rel (0) target = $region9
    $region8: #{_event_model_forward_impl.1} parent=1 // pred_region
      %s18 = ssub.s32 36864, 36864
      %19 = vsyncadd [#allocation3], %s18
      %s20 = sshll.u32 [#allocation2], 4
      %s21 = int_to_ptr.vmem [resolvable:$true] %s20
      %26 = dma.hbm_to_vmem [thread:$0]  %s1, 36864, %s21, [#allocation3], 384, 384, 24
    $region9: #{_event_model_forward_impl.1} parent=1 // pred_fallthru
      _
    // Predicated region
    $region10: #{_event_model_forward_impl.1} parent=1 // pred_check
      _
    $region11: #{_event_model_forward_impl.1} parent=1 // pred_check_branch
      %28 = sbr.rel (0) target = $region13
    $region12: #{_event_model_forward_impl.1} parent=1 // pred_region
      %s30 = ssub.s32 48, 48
      %31 = vsyncadd [#allocation5], %s30
      %s33 = sshll.u32 [#allocation4], 4
      %s34 = int_to_ptr.vmem [resolvable:$true] %s33
      %36 = dma.hbm_to_vmem [thread:$0]  %s2, 48, %s34, [#allocation5]
    $region13: #{_event_model_forward_impl.1} parent=1 // pred_fallthru
      _
    // Predicated region
    $region14: #{_event_model_forward_impl.1} parent=1 // pred_check
      _
    $region15: #{_event_model_forward_impl.1} parent=1 // pred_check_branch
      %38 = sbr.rel (0) target = $region17
    $region16: #{_event_model_forward_impl.1} parent=1 // pred_region
      %s40 = ssub.s32 6144, 6144
      %41 = vsyncadd [#allocation5], %s40
      %s42 = sshll.u32 [#allocation6], 4
      %s43 = int_to_ptr.vmem [resolvable:$true] %s42
      %48 = dma.hbm_to_vmem [thread:$0]  %s3, 6144, %s43, [#allocation5], 128, 128, 8
    $region17: #{_event_model_forward_impl.1} parent=1 // pred_fallthru
      _
    // Predicated region
    $region18: #{_event_model_forward_impl.1} parent=1 // pred_check
      _
    $region19: #{_event_model_forward_impl.1} parent=1 // pred_check_branch
      %50 = sbr.rel (0) target = $region21
    $region20: #{_event_model_forward_impl.1} parent=1 // pred_region
      %s52 = ssub.s32 16, 16
      %53 = vsyncadd [#allocation8], %s52
      %s55 = sshll.u32 [#allocation7], 4
      %s56 = int_to_ptr.vmem [resolvable:$true] %s55
      %58 = dma.hbm_to_vmem [thread:$0]  %s4, 16, %s56, [#allocation8]
    $region21: #{_event_model_forward_impl.1} parent=1 // pred_fallthru
      _
    // Predicated region
    $region22: #{_event_model_forward_impl.1} parent=1 // pred_check
      _
    $region23: #{_event_model_forward_impl.1} parent=1 // pred_check_branch
      %60 = sbr.rel (0) target = $region25
    $region24: #{_event_model_forward_impl.1} parent=1 // pred_region
      %61 = dma.done [#allocation3], 36864
    $region25: #{_event_model_forward_impl.1} parent=1 // pred_fallthru
      _
    // Predicated region
    $region26: #{_event_model_forward_impl.1} parent=1 // pred_check
      _
    $region27: #{_event_model_forward_impl.1} parent=1 // pred_check_branch
      %63 = sbr.rel (0) target = $region29
    $region28: #{_event_model_forward_impl.1} parent=1 // pred_region
      %64 = dma.done [#allocation5], 48
    $region29: #{_event_model_forward_impl.1} parent=1 // pred_fallthru
      _
    // Predicated region
    $region30: #{_event_model_forward_impl.1} parent=1 // pred_check
      _
    $region31: #{_event_model_forward_impl.1} parent=1 // pred_check_branch
      %66 = sbr.rel (0) target = $region33
    $region32: #{_event_model_forward_impl.1} parent=1 // pred_region
      %67 = dma.done [#allocation5], 6144
    $region33: #{_event_model_forward_impl.1} parent=1 // pred_fallthru
      _
    // Predicated region
    $region34: #{_event_model_forward_impl.1} parent=1 // pred_check
      _
    $region35: #{_event_model_forward_impl.1} parent=1 // pred_check_branch
      %69 = sbr.rel (0) target = $region37
    $region36: #{_event_model_forward_impl.1} parent=1 // pred_region
      %70 = dma.done [#allocation8], 16
    $region37: #{_event_model_forward_impl.1} parent=1 // pred_fallthru
      _
    %v71 = vld [vmem:[%s0] sm:$0xff]
    %v72 = vld [vmem:[%s0 + $0x8] sm:$0xff]
    %v73 = vld [vmem:[%s0 + $0x10] sm:$0xff]
    %v74 = vld [vmem:[%s0 + $0x18] sm:$0xff]
    %v75 = vld [vmem:[%s0 + $0x20] sm:$0xff]
    %v76 = vld [vmem:[%s0 + $0x28] sm:$0xff]
    %v77 = vld [vmem:[%s0 + $0x30] sm:$0xff]
    %v78 = vld [vmem:[%s0 + $0x38] sm:$0xff]
    %v79 = vld [vmem:[%s0 + $0x40] sm:$0xff]
    %v80 = vld [vmem:[%s0 + $0x48] sm:$0xff]
    %v81 = vld [vmem:[%s0 + $0x50] sm:$0xff]
    %v82 = vld [vmem:[%s0 + $0x58] sm:$0xff]
    %v83 = vadd.f32 %v71, %v77
    %v84 = vadd.f32 %v72, %v78
    %v85 = vadd.f32 %v73, %v79
    %v86 = vadd.f32 %v74, %v80
    %v87 = vadd.f32 %v75, %v81
    %v88 = vadd.f32 %v76, %v82
    %v89 = vld [vmem:[%s0 + $0x60] sm:$0xff]
    %v90 = vld [vmem:[%s0 + $0x68] sm:$0xff]
    %v91 = vld [vmem:[%s0 + $0x70] sm:$0xff]
    %v92 = vld [vmem:[%s0 + $0x78] sm:$0xff]
    %v93 = vld [vmem:[%s0 + $0x80] sm:$0xff]
    %v94 = vld [vmem:[%s0 + $0x88] sm:$0xff]
    %v95 = vadd.f32 %v83, %v89
    %v96 = vadd.f32 %v84, %v90
    %v97 = vadd.f32 %v85, %v91
    %v98 = vadd.f32 %v86, %v92
    %v99 = vadd.f32 %v87, %v93
    %v100 = vadd.f32 %v88, %v94
    %v101 = vld [vmem:[%s0 + $0x90] sm:$0xff]
    %v102 = vld [vmem:[%s0 + $0x98] sm:$0xff]
    %v103 = vld [vmem:[%s0 + $0xa0] sm:$0xff]
    %v104 = vld [vmem:[%s0 + $0xa8] sm:$0xff]
    %v105 = vld [vmem:[%s0 + $0xb0] sm:$0xff]
    %v106 = vld [vmem:[%s0 + $0xb8] sm:$0xff]
    %v107 = vadd.f32 %v95, %v101
    %v108 = vadd.f32 %v96, %v102
    %v109 = vadd.f32 %v97, %v103
    %v110 = vadd.f32 %v98, %v104
    %v111 = vadd.f32 %v99, %v105
    %v112 = vadd.f32 %v100, %v106
    %v113 = vld [vmem:[%s0 + $0xc0] sm:$0xff]
    %v114 = vld [vmem:[%s0 + $0xc8] sm:$0xff]
    %v115 = vld [vmem:[%s0 + $0xd0] sm:$0xff]
    %v116 = vld [vmem:[%s0 + $0xd8] sm:$0xff]
    %v117 = vld [vmem:[%s0 + $0xe0] sm:$0xff]
    %v118 = vld [vmem:[%s0 + $0xe8] sm:$0xff]
    %v119 = vadd.f32 %v107, %v113
    %v120 = vadd.f32 %v108, %v114
    %v121 = vadd.f32 %v109, %v115
    %v122 = vadd.f32 %v110, %v116
    %v123 = vadd.f32 %v111, %v117
    %v124 = vadd.f32 %v112, %v118
    %v125 = vld [vmem:[%s0 + $0xf0] sm:$0xff]
    %v126 = vld [vmem:[%s0 + $0xf8] sm:$0xff]
    %v127 = vld [vmem:[%s0 + $0x100] sm:$0xff]
    %v128 = vld [vmem:[%s0 + $0x108] sm:$0xff]
    %v129 = vld [vmem:[%s0 + $0x110] sm:$0xff]
    %v130 = vld [vmem:[%s0 + $0x118] sm:$0xff]
    %v131 = vadd.f32 %v119, %v125
    %v132 = vadd.f32 %v120, %v126
    %v133 = vadd.f32 %v121, %v127
    %v134 = vadd.f32 %v122, %v128
    %v135 = vadd.f32 %v123, %v129
    %v136 = vadd.f32 %v124, %v130
    %v137 = vld [vmem:[%s0 + $0x120] sm:$0xff]
    %v138 = vld [vmem:[%s0 + $0x128] sm:$0xff]
    %v139 = vld [vmem:[%s0 + $0x130] sm:$0xff]
    %v140 = vld [vmem:[%s0 + $0x138] sm:$0xff]
    %v141 = vld [vmem:[%s0 + $0x140] sm:$0xff]
    %v142 = vld [vmem:[%s0 + $0x148] sm:$0xff]
    %v143 = vadd.f32 %v131, %v137
    %v144 = vadd.f32 %v132, %v138
    %v145 = vadd.f32 %v133, %v139
    %v146 = vadd.f32 %v134, %v140
    %v147 = vadd.f32 %v135, %v141
    %v148 = vadd.f32 %v136, %v142
    %v149 = vld [vmem:[%s0 + $0x150] sm:$0xff]
    %v150 = vld [vmem:[%s0 + $0x158] sm:$0xff]
    %v151 = vld [vmem:[%s0 + $0x160] sm:$0xff]
    %v152 = vld [vmem:[%s0 + $0x168] sm:$0xff]
    %v153 = vld [vmem:[%s0 + $0x170] sm:$0xff]
    %v154 = vld [vmem:[%s0 + $0x178] sm:$0xff]
    %v155 = vadd.f32 %v143, %v149
    %v156 = vadd.f32 %v144, %v150
    %v157 = vadd.f32 %v145, %v151
    %v158 = vadd.f32 %v146, %v152
    %v159 = vadd.f32 %v147, %v153
    %v160 = vadd.f32 %v148, %v154
    %v161 = vld [vmem:[#allocation2] sm:$0xff]
    %v162 = vld [vmem:[#allocation2 + $0x8] sm:$0xff]
    %v163 = vld [vmem:[#allocation2 + $0x10] sm:$0xff]
    %v164 = vld [vmem:[#allocation2 + $0x18] sm:$0xff]
    %v165 = vld [vmem:[#allocation2 + $0x20] sm:$0xff]
    %v166 = vld [vmem:[#allocation2 + $0x28] sm:$0xff]
    %v167 = vld [vmem:[#allocation2 + $0x30] sm:$0xff]
    %v168 = vld [vmem:[#allocation2 + $0x38] sm:$0xff]
    %v169 = vld [vmem:[#allocation2 + $0x40] sm:$0xff]
    %v170 = vld [vmem:[#allocation2 + $0x48] sm:$0xff]
    %v171 = vld [vmem:[#allocation2 + $0x50] sm:$0xff]
    %v172 = vld [vmem:[#allocation2 + $0x58] sm:$0xff]
    %v173 = vld [vmem:[#allocation2 + $0x60] sm:$0xff]
    %v174 = vld [vmem:[#allocation2 + $0x68] sm:$0xff]
    %v175 = vld [vmem:[#allocation2 + $0x70] sm:$0xff]
    %v176 = vld [vmem:[#allocation2 + $0x78] sm:$0xff]
    %v177 = vld [vmem:[#allocation2 + $0x80] sm:$0xff]
    %v178 = vld [vmem:[#allocation2 + $0x88] sm:$0xff]
    %v179 = vld [vmem:[#allocation2 + $0x90] sm:$0xff]
    %v180 = vld [vmem:[#allocation2 + $0x98] sm:$0xff]
    %v181 = vld [vmem:[#allocation2 + $0xa0] sm:$0xff]
    %v182 = vld [vmem:[#allocation2 + $0xa8] sm:$0xff]
    %v183 = vld [vmem:[#allocation2 + $0xb0] sm:$0xff]
    %v184 = vld [vmem:[#allocation2 + $0xb8] sm:$0xff]
    %v185 = vld [vmem:[#allocation2 + $0xc0] sm:$0xff]
    %v186 = vld [vmem:[#allocation2 + $0xc8] sm:$0xff]
    %v187 = vld [vmem:[#allocation2 + $0xd0] sm:$0xff]
    %v188 = vld [vmem:[#allocation2 + $0xd8] sm:$0xff]
    %v189 = vld [vmem:[#allocation2 + $0xe0] sm:$0xff]
    %v190 = vld [vmem:[#allocation2 + $0xe8] sm:$0xff]
    %v191 = vld [vmem:[#allocation2 + $0xf0] sm:$0xff]
    %v192 = vld [vmem:[#allocation2 + $0xf8] sm:$0xff]
    %v193 = vld [vmem:[#allocation2 + $0x100] sm:$0xff]
    %v194 = vld [vmem:[#allocation2 + $0x108] sm:$0xff]
    %v195 = vld [vmem:[#allocation2 + $0x110] sm:$0xff]
    %v196 = vld [vmem:[#allocation2 + $0x118] sm:$0xff]
    %v197 = vld [vmem:[#allocation2 + $0x120] sm:$0xff]
    %v198 = vld [vmem:[#allocation2 + $0x128] sm:$0xff]
    %v199 = vld [vmem:[#allocation2 + $0x130] sm:$0xff]
    %v200 = vld [vmem:[#allocation2 + $0x138] sm:$0xff]
    %v201 = vld [vmem:[#allocation2 + $0x140] sm:$0xff]
    %v202 = vld [vmem:[#allocation2 + $0x148] sm:$0xff]
    %v203 = vld [vmem:[#allocation2 + $0x150] sm:$0xff]
    %v204 = vld [vmem:[#allocation2 + $0x158] sm:$0xff]
    %v205 = vld [vmem:[#allocation2 + $0x160] sm:$0xff]
    %v206 = vld [vmem:[#allocation2 + $0x168] sm:$0xff]
    %v207 = vld [vmem:[#allocation2 + $0x170] sm:$0xff]
    %v208 = vld [vmem:[#allocation2 + $0x178] sm:$0xff]
    %v209 = vld [vmem:[#allocation2 + $0x180] sm:$0xff]
    %v210 = vld [vmem:[#allocation2 + $0x188] sm:$0xff]
    %v211 = vld [vmem:[#allocation2 + $0x190] sm:$0xff]
    %v212 = vld [vmem:[#allocation2 + $0x198] sm:$0xff]
    %v213 = vld [vmem:[#allocation2 + $0x1a0] sm:$0xff]
    %v214 = vld [vmem:[#allocation2 + $0x1a8] sm:$0xff]
    %v215 = vld [vmem:[#allocation2 + $0x1b0] sm:$0xff]
    %v216 = vld [vmem:[#allocation2 + $0x1b8] sm:$0xff]
    %v217 = vld [vmem:[#allocation2 + $0x1c0] sm:$0xff]
    %v218 = vld [vmem:[#allocation2 + $0x1c8] sm:$0xff]
    %v219 = vld [vmem:[#allocation2 + $0x1d0] sm:$0xff]
    %v220 = vld [vmem:[#allocation2 + $0x1d8] sm:$0xff]
    %v221 = vld [vmem:[#allocation2 + $0x1e0] sm:$0xff]
    %v222 = vld [vmem:[#allocation2 + $0x1e8] sm:$0xff]
    %v223 = vld [vmem:[#allocation2 + $0x1f0] sm:$0xff]
    %v224 = vld [vmem:[#allocation2 + $0x1f8] sm:$0xff]
    %v225 = vld [vmem:[#allocation2 + $0x200] sm:$0xff]
    %v226 = vld [vmem:[#allocation2 + $0x208] sm:$0xff]
    %v227 = vld [vmem:[#allocation2 + $0x210] sm:$0xff]
    %v228 = vld [vmem:[#allocation2 + $0x218] sm:$0xff]
    %v229 = vld [vmem:[#allocation2 + $0x220] sm:$0xff]
    %v230 = vld [vmem:[#allocation2 + $0x228] sm:$0xff]
    %v231 = vld [vmem:[#allocation2 + $0x230] sm:$0xff]
    %v232 = vld [vmem:[#allocation2 + $0x238] sm:$0xff]
    %v233 = vld [vmem:[#allocation2 + $0x240] sm:$0xff]
    %v234 = vld [vmem:[#allocation2 + $0x248] sm:$0xff]
    %v235 = vld [vmem:[#allocation2 + $0x250] sm:$0xff]
    %v236 = vld [vmem:[#allocation2 + $0x258] sm:$0xff]
    %v237 = vld [vmem:[#allocation2 + $0x260] sm:$0xff]
    %v238 = vld [vmem:[#allocation2 + $0x268] sm:$0xff]
    %v239 = vld [vmem:[#allocation2 + $0x270] sm:$0xff]
    %v240 = vld [vmem:[#allocation2 + $0x278] sm:$0xff]
    %v241 = vld [vmem:[#allocation2 + $0x280] sm:$0xff]
    %v242 = vld [vmem:[#allocation2 + $0x288] sm:$0xff]
    %v243 = vld [vmem:[#allocation2 + $0x290] sm:$0xff]
    %v244 = vld [vmem:[#allocation2 + $0x298] sm:$0xff]
    %v245 = vld [vmem:[#allocation2 + $0x2a0] sm:$0xff]
    %v246 = vld [vmem:[#allocation2 + $0x2a8] sm:$0xff]
    %v247 = vld [vmem:[#allocation2 + $0x2b0] sm:$0xff]
    %v248 = vld [vmem:[#allocation2 + $0x2b8] sm:$0xff]
    %v249 = vld [vmem:[#allocation2 + $0x2c0] sm:$0xff]
    %v250 = vld [vmem:[#allocation2 + $0x2c8] sm:$0xff]
    %v251 = vld [vmem:[#allocation2 + $0x2d0] sm:$0xff]
    %v252 = vld [vmem:[#allocation2 + $0x2d8] sm:$0xff]
    %v253 = vld [vmem:[#allocation2 + $0x2e0] sm:$0xff]
    %v254 = vld [vmem:[#allocation2 + $0x2e8] sm:$0xff]
    %v255 = vld [vmem:[#allocation2 + $0x2f0] sm:$0xff]
    %v256 = vld [vmem:[#allocation2 + $0x2f8] sm:$0xff]
    %v257 = vld [vmem:[#allocation2 + $0x300] sm:$0xff]
    %v258 = vld [vmem:[#allocation2 + $0x308] sm:$0xff]
    %v259 = vld [vmem:[#allocation2 + $0x310] sm:$0xff]
    %v260 = vld [vmem:[#allocation2 + $0x318] sm:$0xff]
    %v261 = vld [vmem:[#allocation2 + $0x320] sm:$0xff]
    %v262 = vld [vmem:[#allocation2 + $0x328] sm:$0xff]
    %v263 = vld [vmem:[#allocation2 + $0x330] sm:$0xff]
    %v264 = vld [vmem:[#allocation2 + $0x338] sm:$0xff]
    %v265 = vld [vmem:[#allocation2 + $0x340] sm:$0xff]
    %v266 = vld [vmem:[#allocation2 + $0x348] sm:$0xff]
    %v267 = vld [vmem:[#allocation2 + $0x350] sm:$0xff]
    %v268 = vld [vmem:[#allocation2 + $0x358] sm:$0xff]
    %v269 = vld [vmem:[#allocation2 + $0x360] sm:$0xff]
    %v270 = vld [vmem:[#allocation2 + $0x368] sm:$0xff]
    %v271 = vld [vmem:[#allocation2 + $0x370] sm:$0xff]
    %v272 = vld [vmem:[#allocation2 + $0x378] sm:$0xff]
    %v273 = vld [vmem:[#allocation2 + $0x380] sm:$0xff]
    %v274 = vld [vmem:[#allocation2 + $0x388] sm:$0xff]
    %v275 = vld [vmem:[#allocation2 + $0x390] sm:$0xff]
    %v276 = vld [vmem:[#allocation2 + $0x398] sm:$0xff]
    %v277 = vld [vmem:[#allocation2 + $0x3a0] sm:$0xff]
    %v278 = vld [vmem:[#allocation2 + $0x3a8] sm:$0xff]
    %v279 = vld [vmem:[#allocation2 + $0x3b0] sm:$0xff]
    %v280 = vld [vmem:[#allocation2 + $0x3b8] sm:$0xff]
    %v281 = vld [vmem:[#allocation2 + $0x3c0] sm:$0xff]
    %v282 = vld [vmem:[#allocation2 + $0x3c8] sm:$0xff]
    %v283 = vld [vmem:[#allocation2 + $0x3d0] sm:$0xff]
    %v284 = vld [vmem:[#allocation2 + $0x3d8] sm:$0xff]
    %v285 = vld [vmem:[#allocation2 + $0x3e0] sm:$0xff]
    %v286 = vld [vmem:[#allocation2 + $0x3e8] sm:$0xff]
    %v287 = vld [vmem:[#allocation2 + $0x3f0] sm:$0xff]
    %v288 = vld [vmem:[#allocation2 + $0x3f8] sm:$0xff]
    %v289 = vld [vmem:[#allocation2 + $0x400] sm:$0xff]
    %v290 = vld [vmem:[#allocation2 + $0x408] sm:$0xff]
    %v291 = vld [vmem:[#allocation2 + $0x410] sm:$0xff]
    %v292 = vld [vmem:[#allocation2 + $0x418] sm:$0xff]
    %v293 = vld [vmem:[#allocation2 + $0x420] sm:$0xff]
    %v294 = vld [vmem:[#allocation2 + $0x428] sm:$0xff]
    %v295 = vld [vmem:[#allocation2 + $0x430] sm:$0xff]
    %v296 = vld [vmem:[#allocation2 + $0x438] sm:$0xff]
    %v297 = vld [vmem:[#allocation2 + $0x440] sm:$0xff]
    %v298 = vld [vmem:[#allocation2 + $0x448] sm:$0xff]
    %v299 = vld [vmem:[#allocation2 + $0x450] sm:$0xff]
    %v300 = vld [vmem:[#allocation2 + $0x458] sm:$0xff]
    %v301 = vld [vmem:[#allocation2 + $0x460] sm:$0xff]
    %v302 = vld [vmem:[#allocation2 + $0x468] sm:$0xff]
    %v303 = vld [vmem:[#allocation2 + $0x470] sm:$0xff]
    %v304 = vld [vmem:[#allocation2 + $0x478] sm:$0xff]
    %v305 = vld [vmem:[#allocation2 + $0x480] sm:$0xff]
    %v306 = vld [vmem:[#allocation2 + $0x488] sm:$0xff]
    %v307 = vld [vmem:[#allocation2 + $0x490] sm:$0xff]
    %v308 = vld [vmem:[#allocation2 + $0x498] sm:$0xff]
    %v309 = vld [vmem:[#allocation2 + $0x4a0] sm:$0xff]
    %v310 = vld [vmem:[#allocation2 + $0x4a8] sm:$0xff]
    %v311 = vld [vmem:[#allocation2 + $0x4b0] sm:$0xff]
    %v312 = vld [vmem:[#allocation2 + $0x4b8] sm:$0xff]
    %v313 = vld [vmem:[#allocation2 + $0x4c0] sm:$0xff]
    %v314 = vld [vmem:[#allocation2 + $0x4c8] sm:$0xff]
    %v315 = vld [vmem:[#allocation2 + $0x4d0] sm:$0xff]
    %v316 = vld [vmem:[#allocation2 + $0x4d8] sm:$0xff]
    %v317 = vld [vmem:[#allocation2 + $0x4e0] sm:$0xff]
    %v318 = vld [vmem:[#allocation2 + $0x4e8] sm:$0xff]
    %v319 = vld [vmem:[#allocation2 + $0x4f0] sm:$0xff]
    %v320 = vld [vmem:[#allocation2 + $0x4f8] sm:$0xff]
    %v321 = vld [vmem:[#allocation2 + $0x500] sm:$0xff]
    %v322 = vld [vmem:[#allocation2 + $0x508] sm:$0xff]
    %v323 = vld [vmem:[#allocation2 + $0x510] sm:$0xff]
    %v324 = vld [vmem:[#allocation2 + $0x518] sm:$0xff]
    %v325 = vld [vmem:[#allocation2 + $0x520] sm:$0xff]
    %v326 = vld [vmem:[#allocation2 + $0x528] sm:$0xff]
    %v327 = vld [vmem:[#allocation2 + $0x530] sm:$0xff]
    %v328 = vld [vmem:[#allocation2 + $0x538] sm:$0xff]
    %v329 = vld [vmem:[#allocation2 + $0x540] sm:$0xff]
    %v330 = vld [vmem:[#allocation2 + $0x548] sm:$0xff]
    %v331 = vld [vmem:[#allocation2 + $0x550] sm:$0xff]
    %v332 = vld [vmem:[#allocation2 + $0x558] sm:$0xff]
    %v333 = vld [vmem:[#allocation2 + $0x560] sm:$0xff]
    %v334 = vld [vmem:[#allocation2 + $0x568] sm:$0xff]
    %v335 = vld [vmem:[#allocation2 + $0x570] sm:$0xff]
    %v336 = vld [vmem:[#allocation2 + $0x578] sm:$0xff]
    %v337 = vld [vmem:[#allocation2 + $0x580] sm:$0xff]
    %v338 = vld [vmem:[#allocation2 + $0x588] sm:$0xff]
    %v339 = vld [vmem:[#allocation2 + $0x590] sm:$0xff]
    %v340 = vld [vmem:[#allocation2 + $0x598] sm:$0xff]
    %v341 = vld [vmem:[#allocation2 + $0x5a0] sm:$0xff]
    %v342 = vld [vmem:[#allocation2 + $0x5a8] sm:$0xff]
    %v343 = vld [vmem:[#allocation2 + $0x5b0] sm:$0xff]
    %v344 = vld [vmem:[#allocation2 + $0x5b8] sm:$0xff]
    %v345 = vld [vmem:[#allocation2 + $0x5c0] sm:$0xff]
    %v346 = vld [vmem:[#allocation2 + $0x5c8] sm:$0xff]
    %v347 = vld [vmem:[#allocation2 + $0x5d0] sm:$0xff]
    %v348 = vld [vmem:[#allocation2 + $0x5d8] sm:$0xff]
    %v349 = vld [vmem:[#allocation2 + $0x5e0] sm:$0xff]
    %v350 = vld [vmem:[#allocation2 + $0x5e8] sm:$0xff]
    %v351 = vld [vmem:[#allocation2 + $0x5f0] sm:$0xff]
    %v352 = vld [vmem:[#allocation2 + $0x5f8] sm:$0xff]
    %v353 = vld [vmem:[#allocation2 + $0x600] sm:$0xff]
    %v354 = vld [vmem:[#allocation2 + $0x608] sm:$0xff]
    %v355 = vld [vmem:[#allocation2 + $0x610] sm:$0xff]
    %v356 = vld [vmem:[#allocation2 + $0x618] sm:$0xff]
    %v357 = vld [vmem:[#allocation2 + $0x620] sm:$0xff]
    %v358 = vld [vmem:[#allocation2 + $0x628] sm:$0xff]
    %v359 = vld [vmem:[#allocation2 + $0x630] sm:$0xff]
    %v360 = vld [vmem:[#allocation2 + $0x638] sm:$0xff]
    %v361 = vld [vmem:[#allocation2 + $0x640] sm:$0xff]
    %v362 = vld [vmem:[#allocation2 + $0x648] sm:$0xff]
    %v363 = vld [vmem:[#allocation2 + $0x650] sm:$0xff]
    %v364 = vld [vmem:[#allocation2 + $0x658] sm:$0xff]
    %v365 = vld [vmem:[#allocation2 + $0x660] sm:$0xff]
    %v366 = vld [vmem:[#allocation2 + $0x668] sm:$0xff]
    %v367 = vld [vmem:[#allocation2 + $0x670] sm:$0xff]
    %v368 = vld [vmem:[#allocation2 + $0x678] sm:$0xff]
    %v369 = vld [vmem:[#allocation2 + $0x680] sm:$0xff]
    %v370 = vld [vmem:[#allocation2 + $0x688] sm:$0xff]
    %v371 = vld [vmem:[#allocation2 + $0x690] sm:$0xff]
    %v372 = vld [vmem:[#allocation2 + $0x698] sm:$0xff]
    %v373 = vld [vmem:[#allocation2 + $0x6a0] sm:$0xff]
    %v374 = vld [vmem:[#allocation2 + $0x6a8] sm:$0xff]
    %v375 = vld [vmem:[#allocation2 + $0x6b0] sm:$0xff]
    %v376 = vld [vmem:[#allocation2 + $0x6b8] sm:$0xff]
    %v377 = vld [vmem:[#allocation2 + $0x6c0] sm:$0xff]
    %v378 = vld [vmem:[#allocation2 + $0x6c8] sm:$0xff]
    %v379 = vld [vmem:[#allocation2 + $0x6d0] sm:$0xff]
    %v380 = vld [vmem:[#allocation2 + $0x6d8] sm:$0xff]
    %v381 = vld [vmem:[#allocation2 + $0x6e0] sm:$0xff]
    %v382 = vld [vmem:[#allocation2 + $0x6e8] sm:$0xff]
    %v383 = vld [vmem:[#allocation2 + $0x6f0] sm:$0xff]
    %v384 = vld [vmem:[#allocation2 + $0x6f8] sm:$0xff]
    %v385 = vld [vmem:[#allocation2 + $0x700] sm:$0xff]
    %v386 = vld [vmem:[#allocation2 + $0x708] sm:$0xff]
    %v387 = vld [vmem:[#allocation2 + $0x710] sm:$0xff]
    %v388 = vld [vmem:[#allocation2 + $0x718] sm:$0xff]
    %v389 = vld [vmem:[#allocation2 + $0x720] sm:$0xff]
    %v390 = vld [vmem:[#allocation2 + $0x728] sm:$0xff]
    %v391 = vld [vmem:[#allocation2 + $0x730] sm:$0xff]
    %v392 = vld [vmem:[#allocation2 + $0x738] sm:$0xff]
    %v393 = vld [vmem:[#allocation2 + $0x740] sm:$0xff]
    %v394 = vld [vmem:[#allocation2 + $0x748] sm:$0xff]
    %v395 = vld [vmem:[#allocation2 + $0x750] sm:$0xff]
    %v396 = vld [vmem:[#allocation2 + $0x758] sm:$0xff]
    %v397 = vld [vmem:[#allocation2 + $0x760] sm:$0xff]
    %v398 = vld [vmem:[#allocation2 + $0x768] sm:$0xff]
    %v399 = vld [vmem:[#allocation2 + $0x770] sm:$0xff]
    %v400 = vld [vmem:[#allocation2 + $0x778] sm:$0xff]
    %v401 = vld [vmem:[#allocation2 + $0x780] sm:$0xff]
    %v402 = vld [vmem:[#allocation2 + $0x788] sm:$0xff]
    %v403 = vld [vmem:[#allocation2 + $0x790] sm:$0xff]
    %v404 = vld [vmem:[#allocation2 + $0x798] sm:$0xff]
    %v405 = vld [vmem:[#allocation2 + $0x7a0] sm:$0xff]
    %v406 = vld [vmem:[#allocation2 + $0x7a8] sm:$0xff]
    %v407 = vld [vmem:[#allocation2 + $0x7b0] sm:$0xff]
    %v408 = vld [vmem:[#allocation2 + $0x7b8] sm:$0xff]
    %v409 = vld [vmem:[#allocation2 + $0x7c0] sm:$0xff]
    %v410 = vld [vmem:[#allocation2 + $0x7c8] sm:$0xff]
    %v411 = vld [vmem:[#allocation2 + $0x7d0] sm:$0xff]
    %v412 = vld [vmem:[#allocation2 + $0x7d8] sm:$0xff]
    %v413 = vld [vmem:[#allocation2 + $0x7e0] sm:$0xff]
    %v414 = vld [vmem:[#allocation2 + $0x7e8] sm:$0xff]
    %v415 = vld [vmem:[#allocation2 + $0x7f0] sm:$0xff]
    %v416 = vld [vmem:[#allocation2 + $0x7f8] sm:$0xff]
    %v417 = vld [vmem:[#allocation2 + $0x800] sm:$0xff]
    %v418 = vld [vmem:[#allocation2 + $0x808] sm:$0xff]
    %v419 = vld [vmem:[#allocation2 + $0x810] sm:$0xff]
    %v420 = vld [vmem:[#allocation2 + $0x818] sm:$0xff]
    %v421 = vld [vmem:[#allocation2 + $0x820] sm:$0xff]
    %v422 = vld [vmem:[#allocation2 + $0x828] sm:$0xff]
    %v423 = vld [vmem:[#allocation2 + $0x830] sm:$0xff]
    %v424 = vld [vmem:[#allocation2 + $0x838] sm:$0xff]
    %v425 = vld [vmem:[#allocation2 + $0x840] sm:$0xff]
    %v426 = vld [vmem:[#allocation2 + $0x848] sm:$0xff]
    %v427 = vld [vmem:[#allocation2 + $0x850] sm:$0xff]
    %v428 = vld [vmem:[#allocation2 + $0x858] sm:$0xff]
    %v429 = vld [vmem:[#allocation2 + $0x860] sm:$0xff]
    %v430 = vld [vmem:[#allocation2 + $0x868] sm:$0xff]
    %v431 = vld [vmem:[#allocation2 + $0x870] sm:$0xff]
    %v432 = vld [vmem:[#allocation2 + $0x878] sm:$0xff]
    %v433 = vld [vmem:[#allocation2 + $0x880] sm:$0xff]
    %v434 = vld [vmem:[#allocation2 + $0x888] sm:$0xff]
    %v435 = vld [vmem:[#allocation2 + $0x890] sm:$0xff]
    %v436 = vld [vmem:[#allocation2 + $0x898] sm:$0xff]
    %v437 = vld [vmem:[#allocation2 + $0x8a0] sm:$0xff]
    %v438 = vld [vmem:[#allocation2 + $0x8a8] sm:$0xff]
    %v439 = vld [vmem:[#allocation2 + $0x8b0] sm:$0xff]
    %v440 = vld [vmem:[#allocation2 + $0x8b8] sm:$0xff]
    %v441 = vld [vmem:[#allocation2 + $0x8c0] sm:$0xff]
    %v442 = vld [vmem:[#allocation2 + $0x8c8] sm:$0xff]
    %v443 = vld [vmem:[#allocation2 + $0x8d0] sm:$0xff]
    %v444 = vld [vmem:[#allocation2 + $0x8d8] sm:$0xff]
    %v445 = vld [vmem:[#allocation2 + $0x8e0] sm:$0xff]
    %v446 = vld [vmem:[#allocation2 + $0x8e8] sm:$0xff]
    %v447 = vld [vmem:[#allocation2 + $0x8f0] sm:$0xff]
    %v448 = vld [vmem:[#allocation2 + $0x8f8] sm:$0xff]
    %v449 = vld [vmem:[#allocation4] sm:$0x7]
    %v451 = vlaneseq
    %v452 = vshrl.u32 %v451, 7
    %v453 = vsub.s32 0, %v452
    %v454 = vrot.slane %v449, %v453
    %v455 = vlaneseq
    %v456 = vshrl.u32 %v455, 7
    %v457 = vsub.s32 1, %v456
    %v458 = vrot.slane %v449, %v457
    %v459 = vlaneseq
    %v460 = vshrl.u32 %v459, 7
    %v461 = vsub.s32 2, %v460
    %v462 = vrot.slane %v449, %v461
    %466 = vmatprep.subr.mxu0 %v162
    %467 = vmatpush1.msra.mxu0 %v161
    %468 = vmatprep.subr.mxu0 %v165
    %469 = vmatpush1.msra.mxu0 %v164
    %470 = vmatprep.subr.mxu0 %v168
    %471 = vmatpush1.msra.mxu0 %v167
    %472 = vmatprep.subr.mxu0 %v171
    %473 = vmatpush1.msra.mxu0 %v170
    %474 = vmatprep.subr.mxu0 %v174
    %475 = vmatpush1.msra.mxu0 %v173
    %476 = vmatprep.subr.mxu0 %v177
    %477 = vmatpush1.msra.mxu0 %v176
    %478 = vmatprep.subr.mxu0 %v180
    %479 = vmatpush1.msra.mxu0 %v179
    %480 = vmatprep.subr.mxu0 %v183
    %481 = vmatpush1.msra.mxu0 %v182
    %482 = vmatprep.subr.mxu0 %v186
    %483 = vmatpush1.msra.mxu0 %v185
    %484 = vmatprep.subr.mxu0 %v189
    %485 = vmatpush1.msra.mxu0 %v188
    %486 = vmatprep.subr.mxu0 %v192
    %487 = vmatpush1.msra.mxu0 %v191
    %488 = vmatprep.subr.mxu0 %v195
    %489 = vmatpush1.msra.mxu0 %v194
    %490 = vmatprep.subr.mxu0 %v198
    %491 = vmatpush1.msra.mxu0 %v197
    %492 = vmatprep.subr.mxu0 %v201
    %493 = vmatpush1.msra.mxu0 %v200
    %494 = vmatprep.subr.mxu0 %v204
    %495 = vmatpush1.msra.mxu0 %v203
    %496 = vmatprep.subr.mxu0 %v207
    %497 = vmatpush1.msra.mxu0 %v206
    %498 = vmatprep.subr.mxu0 %v210
    %499 = vmatpush1.msra.mxu0 %v209
    %500 = vmatprep.subr.mxu0 %v213
    %501 = vmatpush1.msra.mxu0 %v212
    %502 = vmatprep.subr.mxu0 %v216
    %503 = vmatpush1.msra.mxu0 %v215
    %504 = vmatprep.subr.mxu0 %v219
    %505 = vmatpush1.msra.mxu0 %v218
    %506 = vmatprep.subr.mxu0 %v222
    %507 = vmatpush1.msra.mxu0 %v221
    %508 = vmatprep.subr.mxu0 %v225
    %509 = vmatpush1.msra.mxu0 %v224
    %510 = vmatprep.subr.mxu0 %v228
    %511 = vmatpush1.msra.mxu0 %v227
    %512 = vmatprep.subr.mxu0 %v231
    %513 = vmatpush1.msra.mxu0 %v230
    %514 = vmatprep.subr.mxu0 %v234
    %515 = vmatpush1.msra.mxu0 %v233
    %516 = vmatprep.subr.mxu0 %v237
    %517 = vmatpush1.msra.mxu0 %v236
    %518 = vmatprep.subr.mxu0 %v240
    %519 = vmatpush1.msra.mxu0 %v239
    %520 = vmatprep.subr.mxu0 %v243
    %521 = vmatpush1.msra.mxu0 %v242
    %522 = vmatprep.subr.mxu0 %v246
    %523 = vmatpush1.msra.mxu0 %v245
    %524 = vmatprep.subr.mxu0 %v249
    %525 = vmatpush1.msra.mxu0 %v248
    %526 = vmatprep.subr.mxu0 %v252
    %527 = vmatpush1.msra.mxu0 %v251
    %528 = vmatprep.subr.mxu0 %v255
    %529 = vmatpush1.msra.mxu0 %v254
    %530 = vmatprep.mubr.f32.mxu0 %v156
    %531 = vmatmul.mubr.f32.gmra.mrb[0].mxu0 %v155
    %v532 = vpop.f32.mrb[0].mxu0
    %v533 = vadd.f32 %v454, %v532
    %v534 = vpop.f32.mrb[0].mxu0
    %v535 = vadd.f32 %v458, %v534
    %536 = vdwg.mxu0
    %537 = vmatprep.subr.mxu0 %v258
    %538 = vmatpush1.msra.mxu0 %v257
    %539 = vmatprep.subr.mxu0 %v261
    %540 = vmatpush1.msra.mxu0 %v260
    %541 = vmatprep.subr.mxu0 %v264
    %542 = vmatpush1.msra.mxu0 %v263
    %543 = vmatprep.subr.mxu0 %v267
    %544 = vmatpush1.msra.mxu0 %v266
    %545 = vmatprep.subr.mxu0 %v270
    %546 = vmatpush1.msra.mxu0 %v269
    %547 = vmatprep.subr.mxu0 %v273
    %548 = vmatpush1.msra.mxu0 %v272
    %549 = vmatprep.subr.mxu0 %v276
    %550 = vmatpush1.msra.mxu0 %v275
    %551 = vmatprep.subr.mxu0 %v279
    %552 = vmatpush1.msra.mxu0 %v278
    %553 = vmatprep.subr.mxu0 %v282
    %554 = vmatpush1.msra.mxu0 %v281
    %555 = vmatprep.subr.mxu0 %v285
    %556 = vmatpush1.msra.mxu0 %v284
    %557 = vmatprep.subr.mxu0 %v288
    %558 = vmatpush1.msra.mxu0 %v287
    %559 = vmatprep.subr.mxu0 %v291
    %560 = vmatpush1.msra.mxu0 %v290
    %561 = vmatprep.subr.mxu0 %v294
    %562 = vmatpush1.msra.mxu0 %v293
    %563 = vmatprep.subr.mxu0 %v297
    %564 = vmatpush1.msra.mxu0 %v296
    %565 = vmatprep.subr.mxu0 %v300
    %566 = vmatpush1.msra.mxu0 %v299
    %567 = vmatprep.subr.mxu0 %v303
    %568 = vmatpush1.msra.mxu0 %v302
    %569 = vmatprep.subr.mxu0 %v306
    %570 = vmatpush1.msra.mxu0 %v305
    %571 = vmatprep.subr.mxu0 %v309
    %572 = vmatpush1.msra.mxu0 %v308
    %573 = vmatprep.subr.mxu0 %v312
    %574 = vmatpush1.msra.mxu0 %v311
    %575 = vmatprep.subr.mxu0 %v315
    %576 = vmatpush1.msra.mxu0 %v314
    %577 = vmatprep.subr.mxu0 %v318
    %578 = vmatpush1.msra.mxu0 %v317
    %579 = vmatprep.subr.mxu0 %v321
    %580 = vmatpush1.msra.mxu0 %v320
    %581 = vmatprep.subr.mxu0 %v324
    %582 = vmatpush1.msra.mxu0 %v323
    %583 = vmatprep.subr.mxu0 %v327
    %584 = vmatpush1.msra.mxu0 %v326
    %585 = vmatprep.subr.mxu0 %v330
    %586 = vmatpush1.msra.mxu0 %v329
    %587 = vmatprep.subr.mxu0 %v333
    %588 = vmatpush1.msra.mxu0 %v332
    %589 = vmatprep.subr.mxu0 %v336
    %590 = vmatpush1.msra.mxu0 %v335
    %591 = vmatprep.subr.mxu0 %v339
    %592 = vmatpush1.msra.mxu0 %v338
    %593 = vmatprep.subr.mxu0 %v342
    %594 = vmatpush1.msra.mxu0 %v341
    %595 = vmatprep.subr.mxu0 %v345
    %596 = vmatpush1.msra.mxu0 %v344
    %597 = vmatprep.subr.mxu0 %v348
    %598 = vmatpush1.msra.mxu0 %v347
    %599 = vmatprep.subr.mxu0 %v351
    %600 = vmatpush1.msra.mxu0 %v350
    %601 = vmatprep.mubr.f32.mxu0 %v158
    %602 = vmatmul.mubr.f32.gmra.mrb[0].mxu0 %v157
    %v603 = vpop.f32.mrb[0].mxu0
    %v604 = vadd.f32 %v533, %v603
    %v605 = vpop.f32.mrb[0].mxu0
    %v606 = vadd.f32 %v535, %v605
    %607 = vdwg.mxu0
    %608 = vmatprep.subr.mxu0 %v354
    %609 = vmatpush1.msra.mxu0 %v353
    %610 = vmatprep.subr.mxu0 %v357
    %611 = vmatpush1.msra.mxu0 %v356
    %612 = vmatprep.subr.mxu0 %v360
    %613 = vmatpush1.msra.mxu0 %v359
    %614 = vmatprep.subr.mxu0 %v363
    %615 = vmatpush1.msra.mxu0 %v362
    %616 = vmatprep.subr.mxu0 %v366
    %617 = vmatpush1.msra.mxu0 %v365
    %618 = vmatprep.subr.mxu0 %v369
    %619 = vmatpush1.msra.mxu0 %v368
    %620 = vmatprep.subr.mxu0 %v372
    %621 = vmatpush1.msra.mxu0 %v371
    %622 = vmatprep.subr.mxu0 %v375
    %623 = vmatpush1.msra.mxu0 %v374
    %624 = vmatprep.subr.mxu0 %v378
    %625 = vmatpush1.msra.mxu0 %v377
    %626 = vmatprep.subr.mxu0 %v381
    %627 = vmatpush1.msra.mxu0 %v380
    %628 = vmatprep.subr.mxu0 %v384
    %629 = vmatpush1.msra.mxu0 %v383
    %630 = vmatprep.subr.mxu0 %v387
    %631 = vmatpush1.msra.mxu0 %v386
    %632 = vmatprep.subr.mxu0 %v390
    %633 = vmatpush1.msra.mxu0 %v389
    %634 = vmatprep.subr.mxu0 %v393
    %635 = vmatpush1.msra.mxu0 %v392
    %636 = vmatprep.subr.mxu0 %v396
    %637 = vmatpush1.msra.mxu0 %v395
    %638 = vmatprep.subr.mxu0 %v399
    %639 = vmatpush1.msra.mxu0 %v398
    %640 = vmatprep.subr.mxu0 %v402
    %641 = vmatpush1.msra.mxu0 %v401
    %642 = vmatprep.subr.mxu0 %v405
    %643 = vmatpush1.msra.mxu0 %v404
    %644 = vmatprep.subr.mxu0 %v408
    %645 = vmatpush1.msra.mxu0 %v407
    %646 = vmatprep.subr.mxu0 %v411
    %647 = vmatpush1.msra.mxu0 %v410
    %648 = vmatprep.subr.mxu0 %v414
    %649 = vmatpush1.msra.mxu0 %v413
    %650 = vmatprep.subr.mxu0 %v417
    %651 = vmatpush1.msra.mxu0 %v416
    %652 = vmatprep.subr.mxu0 %v420
    %653 = vmatpush1.msra.mxu0 %v419
    %654 = vmatprep.subr.mxu0 %v423
    %655 = vmatpush1.msra.mxu0 %v422
    %656 = vmatprep.subr.mxu0 %v426
    %657 = vmatpush1.msra.mxu0 %v425
    %658 = vmatprep.subr.mxu0 %v429
    %659 = vmatpush1.msra.mxu0 %v428
    %660 = vmatprep.subr.mxu0 %v432
    %661 = vmatpush1.msra.mxu0 %v431
    %662 = vmatprep.subr.mxu0 %v435
    %663 = vmatpush1.msra.mxu0 %v434
    %664 = vmatprep.subr.mxu0 %v438
    %665 = vmatpush1.msra.mxu0 %v437
    %666 = vmatprep.subr.mxu0 %v441
    %667 = vmatpush1.msra.mxu0 %v440
    %668 = vmatprep.subr.mxu0 %v444
    %669 = vmatpush1.msra.mxu0 %v443
    %670 = vmatprep.subr.mxu0 %v447
    %671 = vmatpush1.msra.mxu0 %v446
    %672 = vmatprep.mubr.f32.mxu0 %v160
    %673 = vmatmul.mubr.f32.gmra.mrb[0].mxu0 %v159
    %v674 = vpop.f32.mrb[0].mxu0
    %v675 = vadd.f32 %v604, %v674
    %v676 = vpop.f32.mrb[0].mxu0
    %v677 = vadd.f32 %v606, %v676
    %678 = vdwg.mxu0
    %679 = vmatprep.subr.mxu0 0.0
    %680 = vmatpush1.msra.mxu0 %v163
    %681 = vmatprep.subr.mxu0 0.0
    %682 = vmatpush1.msra.mxu0 %v166
    %683 = vmatprep.subr.mxu0 0.0
    %684 = vmatpush1.msra.mxu0 %v169
    %685 = vmatprep.subr.mxu0 0.0
    %686 = vmatpush1.msra.mxu0 %v172
    %687 = vmatprep.subr.mxu0 0.0
    %688 = vmatpush1.msra.mxu0 %v175
    %689 = vmatprep.subr.mxu0 0.0
    %690 = vmatpush1.msra.mxu0 %v178
    %691 = vmatprep.subr.mxu0 0.0
    %692 = vmatpush1.msra.mxu0 %v181
    %693 = vmatprep.subr.mxu0 0.0
    %694 = vmatpush1.msra.mxu0 %v184
    %695 = vmatprep.subr.mxu0 0.0
    %696 = vmatpush1.msra.mxu0 %v187
    %697 = vmatprep.subr.mxu0 0.0
    %698 = vmatpush1.msra.mxu0 %v190
    %699 = vmatprep.subr.mxu0 0.0
    %700 = vmatpush1.msra.mxu0 %v193
    %701 = vmatprep.subr.mxu0 0.0
    %702 = vmatpush1.msra.mxu0 %v196
    %703 = vmatprep.subr.mxu0 0.0
    %704 = vmatpush1.msra.mxu0 %v199
    %705 = vmatprep.subr.mxu0 0.0
    %706 = vmatpush1.msra.mxu0 %v202
    %707 = vmatprep.subr.mxu0 0.0
    %708 = vmatpush1.msra.mxu0 %v205
    %709 = vmatprep.subr.mxu0 0.0
    %710 = vmatpush1.msra.mxu0 %v208
    %711 = vmatprep.subr.mxu0 0.0
    %712 = vmatpush1.msra.mxu0 %v211
    %713 = vmatprep.subr.mxu0 0.0
    %714 = vmatpush1.msra.mxu0 %v214
    %715 = vmatprep.subr.mxu0 0.0
    %716 = vmatpush1.msra.mxu0 %v217
    %717 = vmatprep.subr.mxu0 0.0
    %718 = vmatpush1.msra.mxu0 %v220
    %719 = vmatprep.subr.mxu0 0.0
    %720 = vmatpush1.msra.mxu0 %v223
    %721 = vmatprep.subr.mxu0 0.0
    %722 = vmatpush1.msra.mxu0 %v226
    %723 = vmatprep.subr.mxu0 0.0
    %724 = vmatpush1.msra.mxu0 %v229
    %725 = vmatprep.subr.mxu0 0.0
    %726 = vmatpush1.msra.mxu0 %v232
    %727 = vmatprep.subr.mxu0 0.0
    %728 = vmatpush1.msra.mxu0 %v235
    %729 = vmatprep.subr.mxu0 0.0
    %730 = vmatpush1.msra.mxu0 %v238
    %731 = vmatprep.subr.mxu0 0.0
    %732 = vmatpush1.msra.mxu0 %v241
    %733 = vmatprep.subr.mxu0 0.0
    %734 = vmatpush1.msra.mxu0 %v244
    %735 = vmatprep.subr.mxu0 0.0
    %736 = vmatpush1.msra.mxu0 %v247
    %737 = vmatprep.subr.mxu0 0.0
    %738 = vmatpush1.msra.mxu0 %v250
    %739 = vmatprep.subr.mxu0 0.0
    %740 = vmatpush1.msra.mxu0 %v253
    %741 = vmatprep.subr.mxu0 0.0
    %742 = vmatpush1.msra.mxu0 %v256
    %743 = vmatprep.mubr.f32.mxu0 %v156
    %744 = vmatmul.mubr.f32.gmra.mrb[0].mxu0 %v155
    %v745 = vpop.f32.mrb[0].mxu0
    %v746 = vadd.f32 %v462, %v745
    %v747 = vpop.f32.mrb[0].mxu0
    %748 = vdwg.mxu0
    %749 = vmatprep.subr.mxu0 0.0
    %750 = vmatpush1.msra.mxu0 %v259
    %751 = vmatprep.subr.mxu0 0.0
    %752 = vmatpush1.msra.mxu0 %v262
    %753 = vmatprep.subr.mxu0 0.0
    %754 = vmatpush1.msra.mxu0 %v265
    %755 = vmatprep.subr.mxu0 0.0
    %756 = vmatpush1.msra.mxu0 %v268
    %757 = vmatprep.subr.mxu0 0.0
    %758 = vmatpush1.msra.mxu0 %v271
    %759 = vmatprep.subr.mxu0 0.0
    %760 = vmatpush1.msra.mxu0 %v274
    %761 = vmatprep.subr.mxu0 0.0
    %762 = vmatpush1.msra.mxu0 %v277
    %763 = vmatprep.subr.mxu0 0.0
    %764 = vmatpush1.msra.mxu0 %v280
    %765 = vmatprep.subr.mxu0 0.0
    %766 = vmatpush1.msra.mxu0 %v283
    %767 = vmatprep.subr.mxu0 0.0
    %768 = vmatpush1.msra.mxu0 %v286
    %769 = vmatprep.subr.mxu0 0.0
    %770 = vmatpush1.msra.mxu0 %v289
    %771 = vmatprep.subr.mxu0 0.0
    %772 = vmatpush1.msra.mxu0 %v292
    %773 = vmatprep.subr.mxu0 0.0
    %774 = vmatpush1.msra.mxu0 %v295
    %775 = vmatprep.subr.mxu0 0.0
    %776 = vmatpush1.msra.mxu0 %v298
    %777 = vmatprep.subr.mxu0 0.0
    %778 = vmatpush1.msra.mxu0 %v301
    %779 = vmatprep.subr.mxu0 0.0
    %780 = vmatpush1.msra.mxu0 %v304
    %781 = vmatprep.subr.mxu0 0.0
    %782 = vmatpush1.msra.mxu0 %v307
    %783 = vmatprep.subr.mxu0 0.0
    %784 = vmatpush1.msra.mxu0 %v310
    %785 = vmatprep.subr.mxu0 0.0
    %786 = vmatpush1.msra.mxu0 %v313
    %787 = vmatprep.subr.mxu0 0.0
    %788 = vmatpush1.msra.mxu0 %v316
    %789 = vmatprep.subr.mxu0 0.0
    %790 = vmatpush1.msra.mxu0 %v319
    %791 = vmatprep.subr.mxu0 0.0
    %792 = vmatpush1.msra.mxu0 %v322
    %793 = vmatprep.subr.mxu0 0.0
    %794 = vmatpush1.msra.mxu0 %v325
    %795 = vmatprep.subr.mxu0 0.0
    %796 = vmatpush1.msra.mxu0 %v328
    %797 = vmatprep.subr.mxu0 0.0
    %798 = vmatpush1.msra.mxu0 %v331
    %799 = vmatprep.subr.mxu0 0.0
    %800 = vmatpush1.msra.mxu0 %v334
    %801 = vmatprep.subr.mxu0 0.0
    %802 = vmatpush1.msra.mxu0 %v337
    %803 = vmatprep.subr.mxu0 0.0
    %804 = vmatpush1.msra.mxu0 %v340
    %805 = vmatprep.subr.mxu0 0.0
    %806 = vmatpush1.msra.mxu0 %v343
    %807 = vmatprep.subr.mxu0 0.0
    %808 = vmatpush1.msra.mxu0 %v346
    %809 = vmatprep.subr.mxu0 0.0
    %810 = vmatpush1.msra.mxu0 %v349
    %811 = vmatprep.subr.mxu0 0.0
    %812 = vmatpush1.msra.mxu0 %v352
    %813 = vmatprep.mubr.f32.mxu0 %v158
    %814 = vmatmul.mubr.f32.gmra.mrb[0].mxu0 %v157
    %v815 = vpop.f32.mrb[0].mxu0
    %v816 = vadd.f32 %v746, %v815
    %v817 = vpop.f32.mrb[0].mxu0
    %818 = vdwg.mxu0
    %819 = vmatprep.subr.mxu0 0.0
    %820 = vmatpush1.msra.mxu0 %v355
    %821 = vmatprep.subr.mxu0 0.0
    %822 = vmatpush1.msra.mxu0 %v358
    %823 = vmatprep.subr.mxu0 0.0
    %824 = vmatpush1.msra.mxu0 %v361
    %825 = vmatprep.subr.mxu0 0.0
    %826 = vmatpush1.msra.mxu0 %v364
    %827 = vmatprep.subr.mxu0 0.0
    %828 = vmatpush1.msra.mxu0 %v367
    %829 = vmatprep.subr.mxu0 0.0
    %830 = vmatpush1.msra.mxu0 %v370
    %831 = vmatprep.subr.mxu0 0.0
    %832 = vmatpush1.msra.mxu0 %v373
    %833 = vmatprep.subr.mxu0 0.0
    %834 = vmatpush1.msra.mxu0 %v376
    %835 = vmatprep.subr.mxu0 0.0
    %836 = vmatpush1.msra.mxu0 %v379
    %837 = vmatprep.subr.mxu0 0.0
    %838 = vmatpush1.msra.mxu0 %v382
    %839 = vmatprep.subr.mxu0 0.0
    %840 = vmatpush1.msra.mxu0 %v385
    %841 = vmatprep.subr.mxu0 0.0
    %842 = vmatpush1.msra.mxu0 %v388
    %843 = vmatprep.subr.mxu0 0.0
    %844 = vmatpush1.msra.mxu0 %v391
    %845 = vmatprep.subr.mxu0 0.0
    %846 = vmatpush1.msra.mxu0 %v394
    %847 = vmatprep.subr.mxu0 0.0
    %848 = vmatpush1.msra.mxu0 %v397
    %849 = vmatprep.subr.mxu0 0.0
    %850 = vmatpush1.msra.mxu0 %v400
    %851 = vmatprep.subr.mxu0 0.0
    %852 = vmatpush1.msra.mxu0 %v403
    %853 = vmatprep.subr.mxu0 0.0
    %854 = vmatpush1.msra.mxu0 %v406
    %855 = vmatprep.subr.mxu0 0.0
    %856 = vmatpush1.msra.mxu0 %v409
    %857 = vmatprep.subr.mxu0 0.0
    %858 = vmatpush1.msra.mxu0 %v412
    %859 = vmatprep.subr.mxu0 0.0
    %860 = vmatpush1.msra.mxu0 %v415
    %861 = vmatprep.subr.mxu0 0.0
    %862 = vmatpush1.msra.mxu0 %v418
    %863 = vmatprep.subr.mxu0 0.0
    %864 = vmatpush1.msra.mxu0 %v421
    %865 = vmatprep.subr.mxu0 0.0
    %866 = vmatpush1.msra.mxu0 %v424
    %867 = vmatprep.subr.mxu0 0.0
    %868 = vmatpush1.msra.mxu0 %v427
    %869 = vmatprep.subr.mxu0 0.0
    %870 = vmatpush1.msra.mxu0 %v430
    %871 = vmatprep.subr.mxu0 0.0
    %872 = vmatpush1.msra.mxu0 %v433
    %873 = vmatprep.subr.mxu0 0.0
    %874 = vmatpush1.msra.mxu0 %v436
    %875 = vmatprep.subr.mxu0 0.0
    %876 = vmatpush1.msra.mxu0 %v439
    %877 = vmatprep.subr.mxu0 0.0
    %878 = vmatpush1.msra.mxu0 %v442
    %879 = vmatprep.subr.mxu0 0.0
    %880 = vmatpush1.msra.mxu0 %v445
    %881 = vmatprep.subr.mxu0 0.0
    %882 = vmatpush1.msra.mxu0 %v448
    %883 = vmatprep.mubr.f32.mxu0 %v160
    %884 = vmatmul.mubr.f32.gmra.mrb[0].mxu0 %v159
    %v885 = vpop.f32.mrb[0].mxu0
    %v886 = vadd.f32 %v816, %v885
    %v887 = vpop.f32.mrb[0].mxu0
    %888 = vdwg.mxu0
    %v889 = vld [vmem:[#allocation6] sm:$0xff]
    %v890 = vld [vmem:[#allocation6 + $0x8] sm:$0xff]
    %v891 = vld [vmem:[#allocation6 + $0x10] sm:$0xff]
    %v892 = vld [vmem:[#allocation6 + $0x18] sm:$0xff]
    %v893 = vld [vmem:[#allocation6 + $0x20] sm:$0xff]
    %v894 = vld [vmem:[#allocation6 + $0x28] sm:$0xff]
    %v895 = vld [vmem:[#allocation6 + $0x30] sm:$0xff]
    %v896 = vld [vmem:[#allocation6 + $0x38] sm:$0xff]
    %v897 = vld [vmem:[#allocation6 + $0x40] sm:$0xff]
    %v898 = vld [vmem:[#allocation6 + $0x48] sm:$0xff]
    %v899 = vld [vmem:[#allocation6 + $0x50] sm:$0xff]
    %v900 = vld [vmem:[#allocation6 + $0x58] sm:$0xff]
    %v901 = vld [vmem:[#allocation6 + $0x60] sm:$0xff]
    %v902 = vld [vmem:[#allocation6 + $0x68] sm:$0xff]
    %v903 = vld [vmem:[#allocation6 + $0x70] sm:$0xff]
    %v904 = vld [vmem:[#allocation6 + $0x78] sm:$0xff]
    %v905 = vld [vmem:[#allocation6 + $0x80] sm:$0xff]
    %v906 = vld [vmem:[#allocation6 + $0x88] sm:$0xff]
    %v907 = vld [vmem:[#allocation6 + $0x90] sm:$0xff]
    %v908 = vld [vmem:[#allocation6 + $0x98] sm:$0xff]
    %v909 = vld [vmem:[#allocation6 + $0xa0] sm:$0xff]
    %v910 = vld [vmem:[#allocation6 + $0xa8] sm:$0xff]
    %v911 = vld [vmem:[#allocation6 + $0xb0] sm:$0xff]
    %v912 = vld [vmem:[#allocation6 + $0xb8] sm:$0xff]
    %v913 = vld [vmem:[#allocation6 + $0xc0] sm:$0xff]
    %v914 = vld [vmem:[#allocation6 + $0xc8] sm:$0xff]
    %v915 = vld [vmem:[#allocation6 + $0xd0] sm:$0xff]
    %v916 = vld [vmem:[#allocation6 + $0xd8] sm:$0xff]
    %v917 = vld [vmem:[#allocation6 + $0xe0] sm:$0xff]
    %v918 = vld [vmem:[#allocation6 + $0xe8] sm:$0xff]
    %v919 = vld [vmem:[#allocation6 + $0xf0] sm:$0xff]
    %v920 = vld [vmem:[#allocation6 + $0xf8] sm:$0xff]
    %v921 = vld [vmem:[#allocation6 + $0x100] sm:$0xff]
    %v922 = vld [vmem:[#allocation6 + $0x108] sm:$0xff]
    %v923 = vld [vmem:[#allocation6 + $0x110] sm:$0xff]
    %v924 = vld [vmem:[#allocation6 + $0x118] sm:$0xff]
    %v925 = vld [vmem:[#allocation6 + $0x120] sm:$0xff]
    %v926 = vld [vmem:[#allocation6 + $0x128] sm:$0xff]
    %v927 = vld [vmem:[#allocation6 + $0x130] sm:$0xff]
    %v928 = vld [vmem:[#allocation6 + $0x138] sm:$0xff]
    %v929 = vld [vmem:[#allocation6 + $0x140] sm:$0xff]
    %v930 = vld [vmem:[#allocation6 + $0x148] sm:$0xff]
    %v931 = vld [vmem:[#allocation6 + $0x150] sm:$0xff]
    %v932 = vld [vmem:[#allocation6 + $0x158] sm:$0xff]
    %v933 = vld [vmem:[#allocation6 + $0x160] sm:$0xff]
    %v934 = vld [vmem:[#allocation6 + $0x168] sm:$0xff]
    %v935 = vld [vmem:[#allocation6 + $0x170] sm:$0xff]
    %v936 = vld [vmem:[#allocation6 + $0x178] sm:$0xff]
    %v937 = vld [vmem:[#allocation7] sm:$0x1]
    %v939 = vlaneseq
    %v940 = vshrl.u32 %v939, 7
    %v941 = vsub.s32 0, %v940
    %v942 = vrot.slane %v937, %v941
    %944 = vmatprep.subr.mxu0 0.0
    %945 = vmatpush1.msra.mxu0 %v889
    %946 = vmatprep.subr.mxu0 0.0
    %947 = vmatpush1.msra.mxu0 %v890
    %948 = vmatprep.subr.mxu0 0.0
    %949 = vmatpush1.msra.mxu0 %v891
    %950 = vmatprep.subr.mxu0 0.0
    %951 = vmatpush1.msra.mxu0 %v892
    %952 = vmatprep.subr.mxu0 0.0
    %953 = vmatpush1.msra.mxu0 %v893
    %954 = vmatprep.subr.mxu0 0.0
    %955 = vmatpush1.msra.mxu0 %v894
    %956 = vmatprep.subr.mxu0 0.0
    %957 = vmatpush1.msra.mxu0 %v895
    %958 = vmatprep.subr.mxu0 0.0
    %959 = vmatpush1.msra.mxu0 %v896
    %960 = vmatprep.subr.mxu0 0.0
    %961 = vmatpush1.msra.mxu0 %v897
    %962 = vmatprep.subr.mxu0 0.0
    %963 = vmatpush1.msra.mxu0 %v898
    %964 = vmatprep.subr.mxu0 0.0
    %965 = vmatpush1.msra.mxu0 %v899
    %966 = vmatprep.subr.mxu0 0.0
    %967 = vmatpush1.msra.mxu0 %v900
    %968 = vmatprep.subr.mxu0 0.0
    %969 = vmatpush1.msra.mxu0 %v901
    %970 = vmatprep.subr.mxu0 0.0
    %971 = vmatpush1.msra.mxu0 %v902
    %972 = vmatprep.subr.mxu0 0.0
    %973 = vmatpush1.msra.mxu0 %v903
    %974 = vmatprep.subr.mxu0 0.0
    %975 = vmatpush1.msra.mxu0 %v904
    %976 = vmatprep.subr.mxu0 0.0
    %977 = vmatpush1.msra.mxu0 %v905
    %978 = vmatprep.subr.mxu0 0.0
    %979 = vmatpush1.msra.mxu0 %v906
    %980 = vmatprep.subr.mxu0 0.0
    %981 = vmatpush1.msra.mxu0 %v907
    %982 = vmatprep.subr.mxu0 0.0
    %983 = vmatpush1.msra.mxu0 %v908
    %984 = vmatprep.subr.mxu0 0.0
    %985 = vmatpush1.msra.mxu0 %v909
    %986 = vmatprep.subr.mxu0 0.0
    %987 = vmatpush1.msra.mxu0 %v910
    %988 = vmatprep.subr.mxu0 0.0
    %989 = vmatpush1.msra.mxu0 %v911
    %990 = vmatprep.subr.mxu0 0.0
    %991 = vmatpush1.msra.mxu0 %v912
    %992 = vmatprep.subr.mxu0 0.0
    %993 = vmatpush1.msra.mxu0 %v913
    %994 = vmatprep.subr.mxu0 0.0
    %995 = vmatpush1.msra.mxu0 %v914
    %996 = vmatprep.subr.mxu0 0.0
    %997 = vmatpush1.msra.mxu0 %v915
    %998 = vmatprep.subr.mxu0 0.0
    %999 = vmatpush1.msra.mxu0 %v916
    %1000 = vmatprep.subr.mxu0 0.0
    %1001 = vmatpush1.msra.mxu0 %v917
    %1002 = vmatprep.subr.mxu0 0.0
    %1003 = vmatpush1.msra.mxu0 %v918
    %1004 = vmatprep.subr.mxu0 0.0
    %1005 = vmatpush1.msra.mxu0 %v919
    %1006 = vmatprep.subr.mxu0 0.0
    %1007 = vmatpush1.msra.mxu0 %v920
    %1008 = vmatprep.mubr.f32.mxu0 %v677
    %1009 = vmatmul.mubr.f32.gmra.mrb[0].mxu0 %v675
    %v1010 = vpop.f32.mrb[0].mxu0
    %v1011 = vadd.f32 %v942, %v1010
    %v1012 = vpop.f32.mrb[0].mxu0
    %1013 = vdwg.mxu0
    %1014 = vmatprep.subr.mxu0 0.0
    %1015 = vmatpush1.msra.mxu0 %v921
    %1016 = vmatprep.subr.mxu0 0.0
    %1017 = vmatpush1.msra.mxu0 %v922
    %1018 = vmatprep.subr.mxu0 0.0
    %1019 = vmatpush1.msra.mxu0 %v923
    %1020 = vmatprep.subr.mxu0 0.0
    %1021 = vmatpush1.msra.mxu0 %v924
    %1022 = vmatprep.subr.mxu0 0.0
    %1023 = vmatpush1.msra.mxu0 %v925
    %1024 = vmatprep.subr.mxu0 0.0
    %1025 = vmatpush1.msra.mxu0 %v926
    %1026 = vmatprep.subr.mxu0 0.0
    %1027 = vmatpush1.msra.mxu0 %v927
    %1028 = vmatprep.subr.mxu0 0.0
    %1029 = vmatpush1.msra.mxu0 %v928
    %1030 = vmatprep.subr.mxu0 0.0
    %1031 = vmatpush1.msra.mxu0 %v929
    %1032 = vmatprep.subr.mxu0 0.0
    %1033 = vmatpush1.msra.mxu0 %v930
    %1034 = vmatprep.subr.mxu0 0.0
    %1035 = vmatpush1.msra.mxu0 %v931
    %1036 = vmatprep.subr.mxu0 0.0
    %1037 = vmatpush1.msra.mxu0 %v932
    %1038 = vmatprep.subr.mxu0 0.0
    %1039 = vmatpush1.msra.mxu0 %v933
    %1040 = vmatprep.subr.mxu0 0.0
    %1041 = vmatpush1.msra.mxu0 %v934
    %1042 = vmatprep.subr.mxu0 0.0
    %1043 = vmatpush1.msra.mxu0 %v935
    %1044 = vmatprep.subr.mxu0 0.0
    %1045 = vmatpush1.msra.mxu0 %v936
    %1046 = vmatprep.subr.mxu0 0.0
    %1047 = vmatpush1.msra.mxu0 0.0
    %1048 = vmatprep.subr.mxu0 0.0
    %1049 = vmatpush1.msra.mxu0 0.0
    %1050 = vmatprep.subr.mxu0 0.0
    %1051 = vmatpush1.msra.mxu0 0.0
    %1052 = vmatprep.subr.mxu0 0.0
    %1053 = vmatpush1.msra.mxu0 0.0
    %1054 = vmatprep.subr.mxu0 0.0
    %1055 = vmatpush1.msra.mxu0 0.0
    %1056 = vmatprep.subr.mxu0 0.0
    %1057 = vmatpush1.msra.mxu0 0.0
    %1058 = vmatprep.subr.mxu0 0.0
    %1059 = vmatpush1.msra.mxu0 0.0
    %1060 = vmatprep.subr.mxu0 0.0
    %1061 = vmatpush1.msra.mxu0 0.0
    %1062 = vmatprep.subr.mxu0 0.0
    %1063 = vmatpush1.msra.mxu0 0.0
    %1064 = vmatprep.subr.mxu0 0.0
    %1065 = vmatpush1.msra.mxu0 0.0
    %1066 = vmatprep.subr.mxu0 0.0
    %1067 = vmatpush1.msra.mxu0 0.0
    %1068 = vmatprep.subr.mxu0 0.0
    %1069 = vmatpush1.msra.mxu0 0.0
    %1070 = vmatprep.subr.mxu0 0.0
    %1071 = vmatpush1.msra.mxu0 0.0
    %1072 = vmatprep.subr.mxu0 0.0
    %1073 = vmatpush1.msra.mxu0 0.0
    %1074 = vmatprep.subr.mxu0 0.0
    %1075 = vmatpush1.msra.mxu0 0.0
    %1076 = vmatprep.subr.mxu0 0.0
    %1077 = vmatpush1.msra.mxu0 0.0
    %1078 = vmatprep.mubr.f32.mxu0 0.0
    %1079 = vmatmul.mubr.f32.gmra.mrb[0].mxu0 %v886
    %v1080 = vpop.f32.mrb[0].mxu0
    %v1081 = vadd.f32 %v1011, %v1080
    %v1082 = vpop.f32.mrb[0].mxu0
    %1083 = vdwg.mxu0
    %v1084 = vxor.u32 %v1081, 2147483648
    %v1085 = vmul.f32 %v1084, 1.442695
    %v1086 = vpow.pop %v1085
    %v1087 = vadd.f32 %v1086, 1.0
    %v1088 = vrcp.pop %v1087
    %v1089 = vmul.f32 1.0, %v1088
    %1090 = vst [vmem:[%s5] sm:$0xff] %v1089
    // Predicated region
    $region38: #{_event_model_forward_impl.1} parent=1 // pred_check
      _
    $region39: #{_event_model_forward_impl.1} parent=1 // pred_check_branch
      %1092 = sbr.rel (0) target = $region41
    $region40: #{_event_model_forward_impl.1} parent=1 // pred_region
      _
    $region41: #{_event_model_forward_impl.1} parent=1 // pred_fallthru
      _
    // Predicated region
    $region42: #{_event_model_forward_impl.1} parent=1 // pred_check
      _
    $region43: #{_event_model_forward_impl.1} parent=1 // pred_check_branch
      %1094 = sbr.rel (0) target = $region45
    $region44: #{_event_model_forward_impl.1} parent=1 // pred_region
      _
    $region45: #{_event_model_forward_impl.1} parent=1 // pred_fallthru
      _
    %1095 = vsyncpa [#allocation3], 1
    %1096 = vsyncpa [#allocation5], 1
    %1097 = vsyncpa [#allocation8], 1

</llo_original>
